<compile_context>
chip_gen: v7x
topology: tpu7x:2x2x1
jax: 0.10.0
libtpu: 0.0.40
codegen_flags: <defaults>
</compile_context>

<pallas_src>
import functools

import jax
import jax.numpy as jnp
from jax.experimental import pallas as pl
from jax.experimental.pallas import tpu as pltpu

K = 5            # filter size
PAD = K // 2     # 2
TAPS = K * K     # 25
OUT_CH = 30      # number of HPF filters
THRESHOLD = 3.0

# Flat-spatial lane budget per grid step (f32 output block = 30 * 32768 * 4 B ~= 3.75 MiB,
# double-buffered ~= 7.5 MiB -> safe on v7x's 64 MiB VMEM while still amortizing step overhead).
_MAX_TILE_ELEMS = 32768
_MAX_BATCH_PER_STEP = 8


def _cdiv(a, b):
    return -(-a // b)


def _round_up(x, m):
    return _cdiv(x, m) * m


def hpf_kernel(strips_ref, w_ref, o_ref, *, wp, tile, batch_tile):
    """One grid step.

    strips_ref: (1, 1, bt, tile + halo)  bf16  flat padded-width input window (with halo)
    w_ref:      (30, 25)                 bf16  filter bank, tap index = di*5 + dj
    o_ref:      (bt, 30, tile)           f32   lane-dense flat-spatial output block
    """
    w = w_ref[...]                                                   # (30, 25)

    # Build the (25, bt*tile) patch matrix from static window loads of the strip(s).
    cols = []
    for b in range(batch_tile):                                      # small, fully unrolled
        patches = jnp.concatenate(
            [strips_ref[0, 0, b:b + 1, di * wp + dj: di * wp + dj + tile]
             for di in range(K) for dj in range(K)],
            axis=0)                                                  # (25, tile) bf16
        cols.append(patches)
    patches_all = cols[0] if batch_tile == 1 else jnp.concatenate(cols, axis=1)

    acc = jnp.dot(w, patches_all, preferred_element_type=jnp.float32)  # (30, bt*tile) f32
    acc = jnp.clip(acc, -THRESHOLD, THRESHOLD)                          # TLU

    for b in range(batch_tile):                                      # tile % 128 == 0 -> aligned
        o_ref[b] = acc[:, b * tile:(b + 1) * tile].astype(o_ref.dtype)


def hpf_forward(x, hpf_weight):
    """x: (N, 1, H, W) float32; hpf_weight: (30, 1, 5, 5) float32 -> (N, 30, H, W) float32."""
    N, C, H, W = x.shape
    assert C == 1, "HPF expects a single input channel"

    wp = W + 2 * PAD                      # padded width (W + 4)
    s_img = H * wp                        # flat output domain per image (incl. 4 pad cols / row)
    halo = (K - 1) * wp + (K - 1)         # max tap offset = 4*(W+4) + 4

    # ---- tile selection: 128-lane multiples, cdiv grid (no divisibility requirement) ----------
    num_tiles = max(1, _cdiv(s_img, _MAX_TILE_ELEMS))
    tile = _round_up(_cdiv(s_img, num_tiles), 128)
    num_tiles = _cdiv(s_img, tile)
    # v7x megacore: prefer >= 2 grid steps; for a single small image split it into 2 tiles.
    if N == 1 and num_tiles == 1 and s_img > 128:
        tile = _round_up(_cdiv(s_img, 2), 128)
        num_tiles = _cdiv(s_img, tile)
    s_pad = num_tiles * tile
    strip_len = tile + halo

    # Batch folding (tiny-image path only): one big lane-dense dot per step, but keep >= 2 steps.
    bt = 1
    if num_tiles == 1 and N > 1:
        cap = min(_MAX_BATCH_PER_STEP, N, max(1, _MAX_TILE_ELEMS // tile))
        for d in range(cap, 0, -1):
            if N % d == 0 and N // d >= 2:
                bt = d
                break

    # ---- layout plumbing (no im2col): pad, cast bf16, overlapping strips (~3% duplication) ----
    xpad = jnp.pad(x[:, 0], ((0, 0), (PAD, PAD), (PAD, PAD)))        # (N, H+4, W+4) f32
    xflat = xpad.reshape(N, (H + 2 * PAD) * wp).astype(jnp.bfloat16)
    xflat = jnp.pad(xflat, ((0, 0), (0, s_pad + halo - xflat.shape[1])))
    strips = jnp.stack([xflat[:, t * tile: t * tile + strip_len]
                        for t in range(num_tiles)], axis=1)          # (N, nt, strip_len)
    if bt == 1:
        strips = strips.reshape(N, num_tiles, 1, strip_len)
    else:                                                            # bt > 1 => num_tiles == 1
        strips = strips.reshape(N // bt, 1, bt, strip_len)

    w_mat = hpf_weight.reshape(OUT_CH, TAPS).astype(jnp.bfloat16)    # (30, 25), tap = di*5 + dj

    kern = functools.partial(hpf_kernel, wp=wp, tile=tile, batch_tile=bt)
    out_flat = pl.pallas_call(
        kern,
        out_shape=jax.ShapeDtypeStruct((N, OUT_CH, s_pad), x.dtype),
        grid_spec=pltpu.PrefetchScalarGridSpec(
            num_scalar_prefetch=0,
            grid=(N // bt, num_tiles),
            in_specs=[
                pl.BlockSpec((1, 1, bt, strip_len), lambda nb, ns: (nb, ns, 0, 0)),
                pl.BlockSpec((OUT_CH, TAPS), lambda nb, ns: (0, 0)),
            ],
            out_specs=pl.BlockSpec((bt, OUT_CH, tile), lambda nb, ns: (nb, 0, ns)),
        ),
        compiler_params=pltpu.CompilerParams(
            dimension_semantics=("parallel", "parallel"),
            vmem_limit_bytes=48 * 1024 * 1024),
    )(strips, w_mat)

    # Drop flat-domain padding and the 4 padded-width columns per row.
    return out_flat[:, :, :s_img].reshape(N, OUT_CH, H, wp)[..., :W]


def make_hpf_weights():
    """Deterministic stand-in for the 30 normalized SRM high-pass filters.

    Mimics the original __init__: some filters are 3x3 padded to 5x5, all normalized.
    Shape matches the nn.Parameter of shape (30, 1, 5, 5).
    """
    # TODO(synk): the real SRM coefficients (all_normalized_hpf_list) are not available
    # in-script; using deterministic same-shape stand-ins.
    key = jax.random.PRNGKey(42)
    w = jax.random.normal(key, (OUT_CH, K, K), jnp.float32)
    mask3 = jnp.zeros((K, K), jnp.float32).at[1:4, 1:4].set(1.0)
    w = w.at[:15].set(w[:15] * mask3)                 # first 15: 3x3 kernels padded to 5x5
    w = w / jnp.max(jnp.abs(w), axis=(1, 2), keepdims=True)
    return w.reshape(OUT_CH, 1, K, K)


def _reference(x, hpf_weight):
    # Same bf16 operand quantization as the kernel, f32 accumulation, SAME padding, TLU clamp.
    xq = x.astype(jnp.bfloat16).astype(jnp.float32)
    wq = hpf_weight.astype(jnp.bfloat16).astype(jnp.float32)
    r = jax.lax.conv_general_dilated(
        xq, wq, window_strides=(1, 1), padding="SAME",
        dimension_numbers=("NCHW", "OIHW", "NCHW"),
        preferred_element_type=jnp.float32)
    return jnp.clip(r, -THRESHOLD, THRESHOLD)


if __name__ == "__main__":
    key = jax.random.PRNGKey(0)
    hpf_weight = make_hpf_weights()

    # (2,1,16,16): base case; (8,1,16,16): batch-folding path (bt>1, single dot per step);
    # (1,1,40,40): multi-tile path with flat-domain padding / strip halo across tiles.
    cases = [(2, 16, 16), (8, 16, 16), (1, 40, 40)]
    for i, (n, h, w) in enumerate(cases):
        kx = jax.random.fold_in(key, i)
        x = jax.random.normal(kx, (n, 1, h, w), jnp.float32)

        out = jax.block_until_ready(hpf_forward(x, hpf_weight))
        ref = _reference(x, hpf_weight)

        assert out.shape == (n, OUT_CH, h, w), (out.shape, (n, h, w))
        assert out.dtype == jnp.float32
        max_err = float(jnp.max(jnp.abs(out - ref)))
        assert max_err < 2e-3, ((n, h, w), max_err)

    print("KERNEL_OK")
</pallas_src>

<mosaic_0001>
module attributes {stable_mosaic.version = 11 : i64} {
  func.func @hpf_kernel(%arg0: i32, %arg1: i32, %arg2: memref<1x1x1x468xbf16, #tpu.memory_space<vmem>>, %arg3: memref<30x25xbf16, #tpu.memory_space<vmem>>, %arg4: memref<1x30x384xf32, #tpu.memory_space<vmem>>) attributes {dimension_semantics = [#tpu.dimension_semantics<parallel>, #tpu.dimension_semantics<parallel>], iteration_bounds = array<i64: 2, 1>, scalar_prefetch = 0 : i64, scratch_operands = 0 : i64, tpu.core_type = #tpu.core_type<tc>, window_params = [{transform_indices = @transform_0, window_bounds = array<i64: 1, 1, 1, 468>}, {pipeline_mode = #tpu.pipeline_mode<synchronous>, transform_indices = @transform_1, window_bounds = array<i64: 30, 25>}, {transform_indices = @transform_2, window_bounds = array<i64: 1, 30, 384>}]} {
    %c0 = arith.constant 0 : index
    %c0_0 = arith.constant 0 : index
    %0 = vector.load %arg3[%c0, %c0_0] : memref<30x25xbf16, #tpu.memory_space<vmem>>, vector<30x25xbf16>
    %c0_1 = arith.constant 0 : index
    %c0_2 = arith.constant 0 : index
    %c0_3 = arith.constant 0 : index
    %c0_4 = arith.constant 0 : index
    %1 = vector.load %arg2[%c0_1, %c0_2, %c0_3, %c0_4] : memref<1x1x1x468xbf16, #tpu.memory_space<vmem>>, vector<1x1x1x384xbf16>
    %2 = vector.shape_cast %1 : vector<1x1x1x384xbf16> to vector<1x384xbf16>
    %c0_5 = arith.constant 0 : index
    %c0_6 = arith.constant 0 : index
    %c0_7 = arith.constant 0 : index
    %c1 = arith.constant 1 : index
    %3 = vector.load %arg2[%c0_5, %c0_6, %c0_7, %c1] : memref<1x1x1x468xbf16, #tpu.memory_space<vmem>>, vector<1x1x1x384xbf16>
    %4 = vector.shape_cast %3 : vector<1x1x1x384xbf16> to vector<1x384xbf16>
    %c0_8 = arith.constant 0 : index
    %c0_9 = arith.constant 0 : index
    %c0_10 = arith.constant 0 : index
    %c2 = arith.constant 2 : index
    %5 = vector.load %arg2[%c0_8, %c0_9, %c0_10, %c2] : memref<1x1x1x468xbf16, #tpu.memory_space<vmem>>, vector<1x1x1x384xbf16>
    %6 = vector.shape_cast %5 : vector<1x1x1x384xbf16> to vector<1x384xbf16>
    %c0_11 = arith.constant 0 : index
    %c0_12 = arith.constant 0 : index
    %c0_13 = arith.constant 0 : index
    %c3 = arith.constant 3 : index
    %7 = vector.load %arg2[%c0_11, %c0_12, %c0_13, %c3] : memref<1x1x1x468xbf16, #tpu.memory_space<vmem>>, vector<1x1x1x384xbf16>
    %8 = vector.shape_cast %7 : vector<1x1x1x384xbf16> to vector<1x384xbf16>
    %c0_14 = arith.constant 0 : index
    %c0_15 = arith.constant 0 : index
    %c0_16 = arith.constant 0 : index
    %c4 = arith.constant 4 : index
    %9 = vector.load %arg2[%c0_14, %c0_15, %c0_16, %c4] : memref<1x1x1x468xbf16, #tpu.memory_space<vmem>>, vector<1x1x1x384xbf16>
    %10 = vector.shape_cast %9 : vector<1x1x1x384xbf16> to vector<1x384xbf16>
    %c0_17 = arith.constant 0 : index
    %c0_18 = arith.constant 0 : index
    %c0_19 = arith.constant 0 : index
    %c20 = arith.constant 20 : index
    %11 = vector.load %arg2[%c0_17, %c0_18, %c0_19, %c20] : memref<1x1x1x468xbf16, #tpu.memory_space<vmem>>, vector<1x1x1x384xbf16>
    %12 = vector.shape_cast %11 : vector<1x1x1x384xbf16> to vector<1x384xbf16>
    %c0_20 = arith.constant 0 : index
    %c0_21 = arith.constant 0 : index
    %c0_22 = arith.constant 0 : index
    %c21 = arith.constant 21 : index
    %13 = vector.load %arg2[%c0_20, %c0_21, %c0_22, %c21] : memref<1x1x1x468xbf16, #tpu.memory_space<vmem>>, vector<1x1x1x384xbf16>
    %14 = vector.shape_cast %13 : vector<1x1x1x384xbf16> to vector<1x384xbf16>
    %c0_23 = arith.constant 0 : index
    %c0_24 = arith.constant 0 : index
    %c0_25 = arith.constant 0 : index
    %c22 = arith.constant 22 : index
    %15 = vector.load %arg2[%c0_23, %c0_24, %c0_25, %c22] : memref<1x1x1x468xbf16, #tpu.memory_space<vmem>>, vector<1x1x1x384xbf16>
    %16 = vector.shape_cast %15 : vector<1x1x1x384xbf16> to vector<1x384xbf16>
    %c0_26 = arith.constant 0 : index
    %c0_27 = arith.constant 0 : index
    %c0_28 = arith.constant 0 : index
    %c23 = arith.constant 23 : index
    %17 = vector.load %arg2[%c0_26, %c0_27, %c0_28, %c23] : memref<1x1x1x468xbf16, #tpu.memory_space<vmem>>, vector<1x1x1x384xbf16>
    %18 = vector.shape_cast %17 : vector<1x1x1x384xbf16> to vector<1x384xbf16>
    %c0_29 = arith.constant 0 : index
    %c0_30 = arith.constant 0 : index
    %c0_31 = arith.constant 0 : index
    %c24 = arith.constant 24 : index
    %19 = vector.load %arg2[%c0_29, %c0_30, %c0_31, %c24] : memref<1x1x1x468xbf16, #tpu.memory_space<vmem>>, vector<1x1x1x384xbf16>
    %20 = vector.shape_cast %19 : vector<1x1x1x384xbf16> to vector<1x384xbf16>
    %c0_32 = arith.constant 0 : index
    %c0_33 = arith.constant 0 : index
    %c0_34 = arith.constant 0 : index
    %c40 = arith.constant 40 : index
    %21 = vector.load %arg2[%c0_32, %c0_33, %c0_34, %c40] : memref<1x1x1x468xbf16, #tpu.memory_space<vmem>>, vector<1x1x1x384xbf16>
    %22 = vector.shape_cast %21 : vector<1x1x1x384xbf16> to vector<1x384xbf16>
    %c0_35 = arith.constant 0 : index
    %c0_36 = arith.constant 0 : index
    %c0_37 = arith.constant 0 : index
    %c41 = arith.constant 41 : index
    %23 = vector.load %arg2[%c0_35, %c0_36, %c0_37, %c41] : memref<1x1x1x468xbf16, #tpu.memory_space<vmem>>, vector<1x1x1x384xbf16>
    %24 = vector.shape_cast %23 : vector<1x1x1x384xbf16> to vector<1x384xbf16>
    %c0_38 = arith.constant 0 : index
    %c0_39 = arith.constant 0 : index
    %c0_40 = arith.constant 0 : index
    %c42 = arith.constant 42 : index
    %25 = vector.load %arg2[%c0_38, %c0_39, %c0_40, %c42] : memref<1x1x1x468xbf16, #tpu.memory_space<vmem>>, vector<1x1x1x384xbf16>
    %26 = vector.shape_cast %25 : vector<1x1x1x384xbf16> to vector<1x384xbf16>
    %c0_41 = arith.constant 0 : index
    %c0_42 = arith.constant 0 : index
    %c0_43 = arith.constant 0 : index
    %c43 = arith.constant 43 : index
    %27 = vector.load %arg2[%c0_41, %c0_42, %c0_43, %c43] : memref<1x1x1x468xbf16, #tpu.memory_space<vmem>>, vector<1x1x1x384xbf16>
    %28 = vector.shape_cast %27 : vector<1x1x1x384xbf16> to vector<1x384xbf16>
    %c0_44 = arith.constant 0 : index
    %c0_45 = arith.constant 0 : index
    %c0_46 = arith.constant 0 : index
    %c44 = arith.constant 44 : index
    %29 = vector.load %arg2[%c0_44, %c0_45, %c0_46, %c44] : memref<1x1x1x468xbf16, #tpu.memory_space<vmem>>, vector<1x1x1x384xbf16>
    %30 = vector.shape_cast %29 : vector<1x1x1x384xbf16> to vector<1x384xbf16>
    %c0_47 = arith.constant 0 : index
    %c0_48 = arith.constant 0 : index
    %c0_49 = arith.constant 0 : index
    %c60 = arith.constant 60 : index
    %31 = vector.load %arg2[%c0_47, %c0_48, %c0_49, %c60] : memref<1x1x1x468xbf16, #tpu.memory_space<vmem>>, vector<1x1x1x384xbf16>
    %32 = vector.shape_cast %31 : vector<1x1x1x384xbf16> to vector<1x384xbf16>
    %c0_50 = arith.constant 0 : index
    %c0_51 = arith.constant 0 : index
    %c0_52 = arith.constant 0 : index
    %c61 = arith.constant 61 : index
    %33 = vector.load %arg2[%c0_50, %c0_51, %c0_52, %c61] : memref<1x1x1x468xbf16, #tpu.memory_space<vmem>>, vector<1x1x1x384xbf16>
    %34 = vector.shape_cast %33 : vector<1x1x1x384xbf16> to vector<1x384xbf16>
    %c0_53 = arith.constant 0 : index
    %c0_54 = arith.constant 0 : index
    %c0_55 = arith.constant 0 : index
    %c62 = arith.constant 62 : index
    %35 = vector.load %arg2[%c0_53, %c0_54, %c0_55, %c62] : memref<1x1x1x468xbf16, #tpu.memory_space<vmem>>, vector<1x1x1x384xbf16>
    %36 = vector.shape_cast %35 : vector<1x1x1x384xbf16> to vector<1x384xbf16>
    %c0_56 = arith.constant 0 : index
    %c0_57 = arith.constant 0 : index
    %c0_58 = arith.constant 0 : index
    %c63 = arith.constant 63 : index
    %37 = vector.load %arg2[%c0_56, %c0_57, %c0_58, %c63] : memref<1x1x1x468xbf16, #tpu.memory_space<vmem>>, vector<1x1x1x384xbf16>
    %38 = vector.shape_cast %37 : vector<1x1x1x384xbf16> to vector<1x384xbf16>
    %c0_59 = arith.constant 0 : index
    %c0_60 = arith.constant 0 : index
    %c0_61 = arith.constant 0 : index
    %c64 = arith.constant 64 : index
    %39 = vector.load %arg2[%c0_59, %c0_60, %c0_61, %c64] : memref<1x1x1x468xbf16, #tpu.memory_space<vmem>>, vector<1x1x1x384xbf16>
    %40 = vector.shape_cast %39 : vector<1x1x1x384xbf16> to vector<1x384xbf16>
    %c0_62 = arith.constant 0 : index
    %c0_63 = arith.constant 0 : index
    %c0_64 = arith.constant 0 : index
    %c80 = arith.constant 80 : index
    %41 = vector.load %arg2[%c0_62, %c0_63, %c0_64, %c80] : memref<1x1x1x468xbf16, #tpu.memory_space<vmem>>, vector<1x1x1x384xbf16>
    %42 = vector.shape_cast %41 : vector<1x1x1x384xbf16> to vector<1x384xbf16>
    %c0_65 = arith.constant 0 : index
    %c0_66 = arith.constant 0 : index
    %c0_67 = arith.constant 0 : index
    %c81 = arith.constant 81 : index
    %43 = vector.load %arg2[%c0_65, %c0_66, %c0_67, %c81] : memref<1x1x1x468xbf16, #tpu.memory_space<vmem>>, vector<1x1x1x384xbf16>
    %44 = vector.shape_cast %43 : vector<1x1x1x384xbf16> to vector<1x384xbf16>
    %c0_68 = arith.constant 0 : index
    %c0_69 = arith.constant 0 : index
    %c0_70 = arith.constant 0 : index
    %c82 = arith.constant 82 : index
    %45 = vector.load %arg2[%c0_68, %c0_69, %c0_70, %c82] : memref<1x1x1x468xbf16, #tpu.memory_space<vmem>>, vector<1x1x1x384xbf16>
    %46 = vector.shape_cast %45 : vector<1x1x1x384xbf16> to vector<1x384xbf16>
    %c0_71 = arith.constant 0 : index
    %c0_72 = arith.constant 0 : index
    %c0_73 = arith.constant 0 : index
    %c83 = arith.constant 83 : index
    %47 = vector.load %arg2[%c0_71, %c0_72, %c0_73, %c83] : memref<1x1x1x468xbf16, #tpu.memory_space<vmem>>, vector<1x1x1x384xbf16>
    %48 = vector.shape_cast %47 : vector<1x1x1x384xbf16> to vector<1x384xbf16>
    %c0_74 = arith.constant 0 : index
    %c0_75 = arith.constant 0 : index
    %c0_76 = arith.constant 0 : index
    %c84 = arith.constant 84 : index
    %49 = vector.load %arg2[%c0_74, %c0_75, %c0_76, %c84] : memref<1x1x1x468xbf16, #tpu.memory_space<vmem>>, vector<1x1x1x384xbf16>
    %50 = vector.shape_cast %49 : vector<1x1x1x384xbf16> to vector<1x384xbf16>
    %51 = tpu.concatenate %2, %4, %6, %8, %10, %12, %14, %16, %18, %20, %22, %24, %26, %28, %30, %32 in 0 : vector<1x384xbf16>, vector<1x384xbf16>, vector<1x384xbf16>, vector<1x384xbf16>, vector<1x384xbf16>, vector<1x384xbf16>, vector<1x384xbf16>, vector<1x384xbf16>, vector<1x384xbf16>, vector<1x384xbf16>, vector<1x384xbf16>, vector<1x384xbf16>, vector<1x384xbf16>, vector<1x384xbf16>, vector<1x384xbf16>, vector<1x384xbf16> -> vector<16x384xbf16>
    %52 = tpu.concatenate %34, %36, %38, %40, %42, %44, %46, %48, %50 in 0 : vector<1x384xbf16>, vector<1x384xbf16>, vector<1x384xbf16>, vector<1x384xbf16>, vector<1x384xbf16>, vector<1x384xbf16>, vector<1x384xbf16>, vector<1x384xbf16>, vector<1x384xbf16> -> vector<9x384xbf16>
    %53 = tpu.concatenate %51, %52 in 0 : vector<16x384xbf16>, vector<9x384xbf16> -> vector<25x384xbf16>
    %cst = arith.constant dense<0.000000e+00> : vector<30x384xf32>
    %54 = tpu.matmul %0, %53, %cst {dimension_numbers = #tpu.dot_dimension_numbers<[1], [0], [0], [1], [0, 0, 1, 1], [], []>} : vector<30x25xbf16>, vector<25x384xbf16>, vector<30x384xf32> -> vector<30x384xf32>
    %cst_77 = arith.constant -3.000000e+00 : f32
    %cst_78 = arith.constant 3.000000e+00 : f32
    %55 = vector.broadcast %cst_77 : f32 to vector<30x384xf32>
    %56 = arith.maximumf %55, %54 : vector<30x384xf32>
    %57 = vector.broadcast %cst_78 : f32 to vector<30x384xf32>
    %58 = arith.minimumf %57, %56 : vector<30x384xf32>
    %c0_79 = arith.constant 0 : index
    %c0_80 = arith.constant 0 : index
    %c0_81 = arith.constant 0 : index
    %59 = vector.load %arg4[%c0_79, %c0_80, %c0_81] : memref<1x30x384xf32, #tpu.memory_space<vmem>>, vector<1x30x384xf32>
    %60 = vector.shape_cast %59 : vector<1x30x384xf32> to vector<30x384xf32>
    %61 = vector.shape_cast %58 : vector<30x384xf32> to vector<1x30x384xf32>
    tpu.vector_store %arg4[%c0_79, %c0_80, %c0_81], %61 {strides = array<i32>} : memref<1x30x384xf32, #tpu.memory_space<vmem>>, vector<1x30x384xf32>,
    return
  }
  func.func @transform_0(%arg0: i32, %arg1: i32) -> (i32, i32, i32, i32) {
    %c0_i32 = arith.constant 0 : i32
    %c0_i32_0 = arith.constant 0 : i32
    %c0_i32_1 = arith.constant 0 : i32
    return %arg0, %arg1, %c0_i32, %c0_i32_0 : i32, i32, i32, i32
  }
  func.func @transform_1(%arg0: i32, %arg1: i32) -> (i32, i32) {
    %c0_i32 = arith.constant 0 : i32
    %c0_i32_0 = arith.constant 0 : i32
    %c0_i32_1 = arith.constant 0 : i32
    return %c0_i32, %c0_i32_0 : i32, i32
  }
  func.func @transform_2(%arg0: i32, %arg1: i32) -> (i32, i32, i32) {
    %c0_i32 = arith.constant 0 : i32
    %c0_i32_0 = arith.constant 0 : i32
    return %arg0, %c0_i32, %arg1 : i32, i32, i32
  }
}

</mosaic_0001>

<llo_original>
// kernel: tpu_custom_call.1
$region0: #{tpu_custom_call.1}
  #allocation0 [shape = 'u32[]', space=smem, size = 0x4, offset = 0x4, fixed_abs, tag = 'smem constant byte address 0x4 - core index']
  #allocation1 [shape = 'u32[144,128]{1,0:T(1,128)}', space=vmem, size = 0x12000, scoped, tag = 'internal scratch']
  %s0 = inlined_call_operand.vmem [shape: bf16[2,1,1,468], index: 0, kind: input, shape index: {}]
  %s1 = inlined_call_operand.hbm [shape: bf16[30,25], index: 1, kind: input, shape index: {}]
  %s2 = inlined_call_operand.vmem [shape: f32[2,30,384], index: 2, kind: output, shape index: {}]
  %s3 = sld [smem:[#allocation0]]
  $region45: #{tpu_custom_call.1} parent=0
    _
  %s5 = ssub.s32 1, %s3
  %s6 = scalar_select 0, %s5, %s3
  $region1: #{tpu_custom_call.1} parent=0
    #allocation2 [shape = 'u8[8192]{0}', space=vmem, size = 0x2000, scoped, tag = 'input window, operand 1, single buffered']
    #allocation3 [shape = 's32[2]{0}', space=sflag, size = 0x8, scoped, tag = 'scoped memory for tpu_custom_call.1']
    %7 = vsyncpa [#allocation3], 0
    loop: start=0, step=1, limit=4
    $region2: #{tpu_custom_call.1} parent=1 // loop_pre_header
      _
    $region3: #{tpu_custom_call.1} parent=1 // loop_header
      %s9 = sphi 0, %s13
      %p10 = scmp.ge.s32.totalorder %s9, 4
      %s16 = sphi 0, %s28
      %s17 = sphi 0, %s24
      %s18 = sphi 0, %s16
      %s19 = sphi 0, %s17
      %s20 = sphi 0, %s18
      %s21 = sphi 0, %s19
      %s33 = sphi 0, %s35
      %s36 = sphi 0, %s33
      %s37 = sphi 0, %s36
      %s53 = sphi 0, %s37
      %s57 = sphi 0, %s57
      %s59 = sphi 0, %s57
      %s60 = sphi 0, %s59
      %s74 = sphi 0, %s60
      %s82 = sphi 0, %s84
      %s85 = sphi 0, %s82
      %s86 = sphi 0, %s85
      %s102 = sphi 0, %s86
    $region4: #{tpu_custom_call.1} parent=1 // loop_header_branch
      %12 = sbr.rel (%p10) target = $region8
    $region5: #{tpu_custom_call.1} parent=1 // loop_body
      %s14 = ssub.s32 %s9, 1
      %s15 = ssub.s32 %s9, 2
      %s22 = sadd.s32 1, %s17
      %p23 = scmp.ge.s32.totalorder %s22, 1
      %s24 = scalar_select %p23, 0, %s22
      %s25 = sadd.s32 1, %s16
      %s26 = scalar_select %p23, %s25, %s16
      %p27 = scmp.ge.s32.totalorder %s26, 2
      %s28 = scalar_select %p27, 0, %s26
      %s29 = ssub.s32 %s16, %s28
      %s30 = ssub.s32 %s17, %s24
      %s31 = sor.u32 %s29, %s30
      %p32 = scmp.eq.s32.totalorder %s31, 0
      %s34 = sadd.s32 %s33, 1
      %s35 = scalar_select %p32, %s33, %s34
      %p38 = pneg %p32
      %p39 = scmp.eq.s32.totalorder %s9, 1
      %p40 = por %p38, %p39
      %p41 = scmp.ne.s32.totalorder %s33, %s36
      %p42 = scmp.eq.s32.totalorder %s9, 0
      %p43 = por %p41, %p42
      %p44 = scmp.ne.s32.totalorder %s33, %s36
      %p45 = scmp.eq.s32.totalorder %s14, 1
      %p46 = por %p44, %p45
      %p47 = scmp.ne.s32.totalorder %s36, %s37
      %p48 = scmp.eq.s32.totalorder %s14, 0
      %p49 = por %p47, %p48
      %p50 = scmp.ne.s32.totalorder %s36, %s37
      %p51 = scmp.eq.s32.totalorder %s15, 1
      %p52 = por %p50, %p51
      %p54 = scmp.ne.s32.totalorder %s37, %s53
      %p55 = scmp.eq.s32.totalorder %s15, 0
      %p56 = por %p54, %p55
      %s58 = sadd.s32 %s57, 1
      %p61 = scmp.eq.s32.totalorder %s9, 1
      %p62 = scmp.ne.s32.totalorder %s57, %s59
      %p63 = scmp.eq.s32.totalorder %s9, 0
      %p64 = por %p62, %p63
      %p65 = scmp.ne.s32.totalorder %s57, %s59
      %p66 = scmp.eq.s32.totalorder %s14, 1
      %p67 = por %p65, %p66
      %p68 = scmp.ne.s32.totalorder %s59, %s60
      %p69 = scmp.eq.s32.totalorder %s14, 0
      %p70 = por %p68, %p69
      %p71 = scmp.ne.s32.totalorder %s59, %s60
      %p72 = scmp.eq.s32.totalorder %s15, 1
      %p73 = por %p71, %p72
      %p75 = scmp.ne.s32.totalorder %s60, %s74
      %p76 = scmp.eq.s32.totalorder %s15, 0
      %p77 = por %p75, %p76
      %s78 = ssub.s32 %s16, %s28
      %s79 = ssub.s32 %s17, %s24
      %s80 = sor.u32 %s78, %s79
      %p81 = scmp.eq.s32.totalorder %s80, 0
      %s83 = sadd.s32 %s82, 1
      %s84 = scalar_select %p81, %s82, %s83
      %p87 = pneg %p81
      %p88 = scmp.eq.s32.totalorder %s9, 1
      %p89 = por %p87, %p88
      %p90 = scmp.ne.s32.totalorder %s82, %s85
      %p91 = scmp.eq.s32.totalorder %s9, 0
      %p92 = por %p90, %p91
      %p93 = scmp.ne.s32.totalorder %s82, %s85
      %p94 = scmp.eq.s32.totalorder %s14, 1
      %p95 = por %p93, %p94
      %p96 = scmp.ne.s32.totalorder %s85, %s86
      %p97 = scmp.eq.s32.totalorder %s14, 0
      %p98 = por %p96, %p97
      %p99 = scmp.ne.s32.totalorder %s85, %s86
      %p100 = scmp.eq.s32.totalorder %s15, 1
      %p101 = por %p99, %p100
      %p103 = scmp.ne.s32.totalorder %s86, %s102
      %p104 = scmp.eq.s32.totalorder %s15, 0
      %p105 = por %p103, %p104
      %p106 = scmp.le.s32.totalorder 1, %s9
      %p107 = scmp.lt.s32.totalorder %s9, 3
      %p108 = pnand %p106, %p107
      %p109 = pneg %p108
      // Predicated region
      $region9: #{tpu_custom_call.1} parent=5 // pred_check
        _
      $region10: #{tpu_custom_call.1} parent=5 // pred_check_branch
        %111 = sbr.rel (%p108) target = $region12
      $region11: #{tpu_custom_call.1} parent=5 // pred_region
        %s112 = ssub.s32 %s9, 1
        // Predicated region
        $region13: #{tpu_custom_call.1} parent=11 // pred_check
          %p113 = pneg %p70
        $region14: #{tpu_custom_call.1} parent=11 // pred_check_branch
          %115 = sbr.rel (%p113) target = $region16
        $region15: #{tpu_custom_call.1} parent=11 // pred_region
          %s117 = ssub.s32 256, 256
          %118 = vsyncadd [#allocation3], %s117
          %s119 = sshll.u32 [#allocation2], 4
          %s120 = int_to_ptr.vmem [resolvable:$true] %s119
          %125 = dma.hbm_to_vmem [thread:$0]  %s1, 256, %s120, [#allocation3], 64, 64, 4
        $region16: #{tpu_custom_call.1} parent=11 // pred_fallthru
          _
      $region12: #{tpu_custom_call.1} parent=5 // pred_fallthru
        _
      %p126 = scmp.lt.s32.totalorder %s9, 2
      // Predicated region
      $region17: #{tpu_custom_call.1} parent=5 // pred_check
        %p127 = pneg %p126
      $region18: #{tpu_custom_call.1} parent=5 // pred_check_branch
        %129 = sbr.rel (%p127) target = $region20
      $region19: #{tpu_custom_call.1} parent=5 // pred_region
        // Predicated region
        $region21: #{tpu_custom_call.1} parent=19 // pred_check
          %p130 = pneg %p43
        $region22: #{tpu_custom_call.1} parent=19 // pred_check_branch
          %132 = sbr.rel (%p130) target = $region24
        $region23: #{tpu_custom_call.1} parent=19 // pred_region
          %p133 = scmp.lt.s32.totalorder %s16, 1
          %s134 = scalar_select %p133, %s16, 1
          %p135 = scmp.lt.s32.totalorder %s17, 0
          %s136 = scalar_select %p135, %s17, 0
          %s137 = smul.addr %s136, 4
          %s138 = smul.addr %s134, 4
          %s139 = sadd.s32 %s137, %s138
          %s140 = scalar_lea.vmem %s0, %s139
        $region24: #{tpu_custom_call.1} parent=19 // pred_fallthru
          _
      $region20: #{tpu_custom_call.1} parent=5 // pred_fallthru
        _
      %p141 = scmp.le.s32.totalorder 1, %s9
      %p142 = scmp.lt.s32.totalorder %s9, 3
      %p143 = pnand %p141, %p142
      %p144 = pneg %p143
      // Predicated region
      $region25: #{tpu_custom_call.1} parent=5 // pred_check
        _
      $region26: #{tpu_custom_call.1} parent=5 // pred_check_branch
        %146 = sbr.rel (%p143) target = $region28
      $region27: #{tpu_custom_call.1} parent=5 // pred_region
        %s147 = ssub.s32 %s9, 1
        // Predicated region
        $region29: #{tpu_custom_call.1} parent=27 // pred_check
          %p148 = pneg %p70
        $region30: #{tpu_custom_call.1} parent=27 // pred_check_branch
          %150 = sbr.rel (%p148) target = $region32
        $region31: #{tpu_custom_call.1} parent=27 // pred_region
          %151 = dma.done [#allocation3], 256
        $region32: #{tpu_custom_call.1} parent=27 // pred_fallthru
          _
        %p152 = scmp.lt.s32.totalorder %s18, 1
        %s153 = scalar_select %p152, %s18, 1
        %p154 = scmp.lt.s32.totalorder %s19, 0
        %s155 = scalar_select %p154, %s19, 0
        %s156 = smul.addr %s155, 4
        %s157 = smul.addr %s153, 4
        %s158 = sadd.s32 %s156, %s157
        %s159 = scalar_lea.vmem %s0, %s158
        %p160 = pneg %p49
        %p161 = pneg %p46
        %p162 = pneg %p70
        %p163 = pneg %p67
        %p164 = pneg %p98
        %p165 = pneg %p95
        %s166 = smul.u32 3, %s19
        %p167 = scmp.lt.s32.totalorder %s18, 1
        %s168 = scalar_select %p167, %s18, 1
        %p169 = scmp.lt.s32.totalorder %s166, 2
        %s170 = scalar_select %p169, %s166, 2
        %s171 = smul.addr %s168, 12
        %s172 = sadd.s32 %s170, %s171
        %s173 = smul.addr %s172, 8
        %s174 = scalar_lea.vmem %s2, %s173
        %p175 = scmp.lt.s32.totalorder %s18, 1
        %s176 = scalar_select %p175, %s18, 1
        %p177 = scmp.lt.s32.totalorder %s19, 0
        %s178 = scalar_select %p177, %s19, 0
        %s179 = smul.addr %s178, 4
        %s180 = smul.addr %s176, 4
        %s181 = sadd.s32 %s179, %s180
        %s182 = scalar_lea.vmem %s0, %s181
        %s183 = smul.u32 3, %s19
        %p184 = scmp.lt.s32.totalorder %s18, 1
        %s185 = scalar_select %p184, %s18, 1
        %p186 = scmp.lt.s32.totalorder %s183, 2
        %s187 = scalar_select %p186, %s183, 2
        %s188 = smul.addr %s185, 12
        %s189 = sadd.s32 %s187, %s188
        %s190 = smul.addr %s189, 8
        %s191 = scalar_lea.vmem %s2, %s190
        %s192 = smul.u32 3, %s19
        %v194 = vld [vmem:[#allocation2] sm:$0xf]
        %v195 = vld [vmem:[#allocation2 + $0x4] sm:$0xf]
        %v196 = vld [vmem:[#allocation2 + $0x8] sm:$0xf]
        %v197 = vld [vmem:[#allocation2 + $0xc] sm:$0x7]
        %v198 = vld [vmem:[%s182] sm:$0x7]
        %v199 = vld [vmem:[%s182] sm:$0xf]
        %v202 = vunpack.c.l.s4 1966171168
        %v203 = vunpack.c.0.s8 %v202
        %v204 = vlaneseq
        %v205 = vshrl.u32 %v204, 7
        %v206 = vsub.s32 %v203, %v205
        %v207 = vrot.slane %v198, %v206
        %v208 = vcombine.high %v207, %v207
        %v210 = vunpack.c.l.s4 1966171168
        %v211 = vunpack.c.0.s8 %v210
        %v212 = vlaneseq
        %v213 = vshrl.u32 %v212, 7
        %v214 = vsub.s32 %v211, %v213
        %v215 = vrot.slane %v207, %v214
        %v217 = vunpack.c.l.s4 1966171168
        %v218 = vunpack.c.0.s8 %v217
        %v219 = vlaneseq
        %v220 = vshrl.u32 %v219, 7
        %v221 = vsub.s32 %v218, %v220
        %v222 = vrot.slane %v208, %v221
        %v223 = vcombine.high %v215, %v215
        %v229 = vunpack.c.l.s4 1966171168
        %v230 = vunpack.c.0.s8 %v229
        %v231 = vlaneseq
        %v232 = vshrl.u32 %v231, 7
        %v233 = vsub.s32 %v230, %v232
        %v234 = vrot.slane %v199, %v233
        %v235 = vcombine.high %v234, %v234
        %v237 = vunpack.c.l.s4 1966171168
        %v238 = vunpack.c.0.s8 %v237
        %v239 = vlaneseq
        %v240 = vshrl.u32 %v239, 7
        %v241 = vsub.s32 %v238, %v240
        %v242 = vrot.slane %v234, %v241
        %v244 = vunpack.c.l.s4 1966171168
        %v245 = vunpack.c.0.s8 %v244
        %v246 = vlaneseq
        %v247 = vshrl.u32 %v246, 7
        %v248 = vsub.s32 %v245, %v247
        %v249 = vrot.slane %v235, %v248
        %v250 = vcombine.high %v242, %v242
        %v251 = vcombine.high %v249, %v249
        %v253 = vshll.u32 %v242, 16
        %v256 = vshll.u32 %v249, 16
        %v259 = vshll.u32 %v250, 16
        %v262 = vshll.u32 %v251, 16
        %264 = vrot.lane.b32.xlu0 %v253, 127
        %v265 = vpop.permute.xlu0 %264
        %266 = vrot.lane.b32.xlu0 %v256, 127
        %v267 = vpop.permute.xlu0 %266
        %268 = vrot.lane.b32.xlu0 %v259, 127
        %v269 = vpop.permute.xlu0 %268
        %270 = vrot.lane.b32.xlu0 %v262, 127
        %v271 = vpop.permute.xlu0 %270
        %vm272 = vcmask 1039360
        %v273 = vsel %vm272, %v265, %v267
        %v274 = vsel %vm272, %v267, %v269
        %v275 = vsel %vm272, %v269, %v271
        %v279 = vcombine.low %v199, %v199
        %v281 = vunpack.c.l.s4 1966171168
        %v282 = vunpack.c.0.s8 %v281
        %v283 = vlaneseq
        %v284 = vshrl.u32 %v283, 7
        %v285 = vsub.s32 %v282, %v284
        %v286 = vrot.slane %v279, %v285
        %v287 = vcombine.high %v286, %v286
        %v289 = vunpack.c.l.s4 1966171168
        %v290 = vunpack.c.0.s8 %v289
        %v291 = vlaneseq
        %v292 = vshrl.u32 %v291, 7
        %v293 = vsub.s32 %v290, %v292
        %v294 = vrot.slane %v286, %v293
        %v296 = vunpack.c.l.s4 1966171168
        %v297 = vunpack.c.0.s8 %v296
        %v298 = vlaneseq
        %v299 = vshrl.u32 %v298, 7
        %v300 = vsub.s32 %v297, %v299
        %v301 = vrot.slane %v287, %v300
        %v302 = vcombine.high %v294, %v294
        %v303 = vcombine.high %v301, %v301
        %304 = vrot.lane.b32.xlu0 %v294, 126
        %v305 = vpop.permute.xlu0 %304
        %306 = vrot.lane.b32.xlu0 %v301, 126
        %v307 = vpop.permute.xlu0 %306
        %308 = vrot.lane.b32.xlu0 %v302, 126
        %v309 = vpop.permute.xlu0 %308
        %310 = vrot.lane.b32.xlu0 %v303, 126
        %v311 = vpop.permute.xlu0 %310
        %vm312 = vcmask 1031168
        %v313 = vsel %vm312, %v305, %v307
        %v314 = vsel %vm312, %v307, %v309
        %v315 = vsel %vm312, %v309, %v311
        %v316 = vrot.slane %v253, 7
        %v317 = vrot.slane %v256, 7
        %v318 = vrot.slane %v259, 7
        %v319 = vrot.slane %v262, 7
        %320 = vrot.lane.b32.xlu0 %v316, 125
        %v321 = vpop.permute.xlu0 %320
        %322 = vrot.lane.b32.xlu0 %v317, 125
        %v323 = vpop.permute.xlu0 %322
        %324 = vrot.lane.b32.xlu0 %v318, 125
        %v325 = vpop.permute.xlu0 %324
        %326 = vrot.lane.b32.xlu0 %v319, 125
        %v327 = vpop.permute.xlu0 %326
        %vm328 = vcmask 1022976
        %v329 = vsel %vm328, %v321, %v323
        %v330 = vsel %vm328, %v323, %v325
        %v331 = vsel %vm328, %v325, %v327
        %v335 = vcombine.low %v234, %v234
        %v337 = vunpack.c.l.s4 1966171168
        %v338 = vunpack.c.0.s8 %v337
        %v339 = vlaneseq
        %v340 = vshrl.u32 %v339, 7
        %v341 = vsub.s32 %v338, %v340
        %v342 = vrot.slane %v335, %v341
        %v343 = vcombine.high %v342, %v342
        %344 = vrot.lane.b32.xlu0 %v342, 124
        %v345 = vpop.permute.xlu0 %344
        %346 = vrot.lane.b32.xlu0 %v242, 124
        %v347 = vpop.permute.xlu0 %346
        %348 = vrot.lane.b32.xlu0 %v343, 124
        %v349 = vpop.permute.xlu0 %348
        %350 = vrot.lane.b32.xlu0 %v250, 124
        %v351 = vpop.permute.xlu0 %350
        %vm352 = vcmask 1014784
        %v353 = vsel %vm352, %v345, %v347
        %v354 = vsel %vm352, %v347, %v349
        %v355 = vsel %vm352, %v349, %v351
        %v356 = vrot.slane %v253, 6
        %v357 = vrot.slane %v256, 6
        %v358 = vrot.slane %v259, 6
        %v359 = vrot.slane %v262, 6
        %360 = vrot.lane.b32.xlu0 %v356, 108
        %v361 = vpop.permute.xlu0 %360
        %362 = vrot.lane.b32.xlu0 %v357, 108
        %v363 = vpop.permute.xlu0 %362
        %364 = vrot.lane.b32.xlu0 %v358, 108
        %v365 = vpop.permute.xlu0 %364
        %366 = vrot.lane.b32.xlu0 %v359, 108
        %v367 = vpop.permute.xlu0 %366
        %vm368 = vcmask 883712
        %v369 = vsel %vm368, %v361, %v363
        %v370 = vsel %vm368, %v363, %v365
        %v371 = vsel %vm368, %v365, %v367
        %v375 = vcombine.low %v286, %v286
        %v377 = vunpack.c.l.s4 1966171168
        %v378 = vunpack.c.0.s8 %v377
        %v379 = vlaneseq
        %v380 = vshrl.u32 %v379, 7
        %v381 = vsub.s32 %v378, %v380
        %v382 = vrot.slane %v375, %v381
        %v383 = vcombine.high %v382, %v382
        %384 = vrot.lane.b32.xlu0 %v382, 107
        %v385 = vpop.permute.xlu0 %384
        %386 = vrot.lane.b32.xlu0 %v294, 107
        %v387 = vpop.permute.xlu0 %386
        %388 = vrot.lane.b32.xlu0 %v383, 107
        %v389 = vpop.permute.xlu0 %388
        %390 = vrot.lane.b32.xlu0 %v302, 107
        %v391 = vpop.permute.xlu0 %390
        %vm392 = vcmask 875520
        %v393 = vsel %vm392, %v385, %v387
        %v394 = vsel %vm392, %v387, %v389
        %v395 = vsel %vm392, %v389, %v391
        %v396 = vrot.slane %v253, 5
        %v397 = vrot.slane %v256, 5
        %v398 = vrot.slane %v259, 5
        %v399 = vrot.slane %v262, 5
        %400 = vrot.lane.b32.xlu0 %v396, 106
        %v401 = vpop.permute.xlu0 %400
        %402 = vrot.lane.b32.xlu0 %v397, 106
        %v403 = vpop.permute.xlu0 %402
        %404 = vrot.lane.b32.xlu0 %v398, 106
        %v405 = vpop.permute.xlu0 %404
        %406 = vrot.lane.b32.xlu0 %v399, 106
        %v407 = vpop.permute.xlu0 %406
        %vm408 = vcmask 867328
        %v409 = vsel %vm408, %v401, %v403
        %v410 = vsel %vm408, %v403, %v405
        %v411 = vsel %vm408, %v405, %v407
        %v415 = vcombine.low %v242, %v242
        %v416 = vcombine.low %v249, %v249
        %417 = vrot.lane.b32.xlu0 %v415, 105
        %v418 = vpop.permute.xlu0 %417
        %419 = vrot.lane.b32.xlu0 %v416, 105
        %v420 = vpop.permute.xlu0 %419
        %421 = vrot.lane.b32.xlu0 %v242, 105
        %v422 = vpop.permute.xlu0 %421
        %423 = vrot.lane.b32.xlu0 %v249, 105
        %v424 = vpop.permute.xlu0 %423
        %vm425 = vcmask 859136
        %v426 = vsel %vm425, %v418, %v420
        %v427 = vsel %vm425, %v420, %v422
        %v428 = vsel %vm425, %v422, %v424
        %v429 = vrot.slane %v253, 4
        %v430 = vrot.slane %v256, 4
        %v431 = vrot.slane %v259, 4
        %v432 = vrot.slane %v262, 4
        %433 = vrot.lane.b32.xlu0 %v429, 104
        %v434 = vpop.permute.xlu0 %433
        %435 = vrot.lane.b32.xlu0 %v430, 104
        %v436 = vpop.permute.xlu0 %435
        %437 = vrot.lane.b32.xlu0 %v431, 104
        %v438 = vpop.permute.xlu0 %437
        %439 = vrot.lane.b32.xlu0 %v432, 104
        %v440 = vpop.permute.xlu0 %439
        %vm441 = vcmask 850944
        %v442 = vsel %vm441, %v434, %v436
        %v443 = vsel %vm441, %v436, %v438
        %v444 = vsel %vm441, %v438, %v440
        %v448 = vcombine.low %v294, %v294
        %v449 = vcombine.low %v301, %v301
        %450 = vrot.lane.b32.xlu0 %v448, 88
        %v451 = vpop.permute.xlu0 %450
        %452 = vrot.lane.b32.xlu0 %v449, 88
        %v453 = vpop.permute.xlu0 %452
        %454 = vrot.lane.b32.xlu0 %v294, 88
        %v455 = vpop.permute.xlu0 %454
        %456 = vrot.lane.b32.xlu0 %v301, 88
        %v457 = vpop.permute.xlu0 %456
        %vm458 = vcmask 719872
        %v459 = vsel %vm458, %v451, %v453
        %v460 = vsel %vm458, %v453, %v455
        %v461 = vsel %vm458, %v455, %v457
        %v462 = vrot.slane %v253, 3
        %v463 = vrot.slane %v256, 3
        %v464 = vrot.slane %v259, 3
        %v465 = vrot.slane %v262, 3
        %466 = vrot.lane.b32.xlu0 %v462, 87
        %v467 = vpop.permute.xlu0 %466
        %468 = vrot.lane.b32.xlu0 %v463, 87
        %v469 = vpop.permute.xlu0 %468
        %470 = vrot.lane.b32.xlu0 %v464, 87
        %v471 = vpop.permute.xlu0 %470
        %472 = vrot.lane.b32.xlu0 %v465, 87
        %v473 = vpop.permute.xlu0 %472
        %vm474 = vcmask 711680
        %v475 = vsel %vm474, %v467, %v469
        %v476 = vsel %vm474, %v469, %v471
        %v477 = vsel %vm474, %v471, %v473
        %v481 = vcombine.low %v342, %v342
        %482 = vrot.lane.b32.xlu0 %v481, 86
        %v483 = vpop.permute.xlu0 %482
        %484 = vrot.lane.b32.xlu0 %v415, 86
        %v485 = vpop.permute.xlu0 %484
        %486 = vrot.lane.b32.xlu0 %v342, 86
        %v487 = vpop.permute.xlu0 %486
        %488 = vrot.lane.b32.xlu0 %v242, 86
        %v489 = vpop.permute.xlu0 %488
        %vm490 = vcmask 703488
        %v491 = vsel %vm490, %v483, %v485
        %v492 = vsel %vm490, %v485, %v487
        %v493 = vsel %vm490, %v487, %v489
        %v494 = vrot.slane %v253, 2
        %v495 = vrot.slane %v256, 2
        %v496 = vrot.slane %v259, 2
        %v497 = vrot.slane %v262, 2
        %498 = vrot.lane.b32.xlu0 %v494, 85
        %v499 = vpop.permute.xlu0 %498
        %500 = vrot.lane.b32.xlu0 %v495, 85
        %v501 = vpop.permute.xlu0 %500
        %502 = vrot.lane.b32.xlu0 %v496, 85
        %v503 = vpop.permute.xlu0 %502
        %504 = vrot.lane.b32.xlu0 %v497, 85
        %v505 = vpop.permute.xlu0 %504
        %vm506 = vcmask 695296
        %v507 = vsel %vm506, %v499, %v501
        %v508 = vsel %vm506, %v501, %v503
        %v509 = vsel %vm506, %v503, %v505
        %v513 = vcombine.low %v382, %v382
        %514 = vrot.lane.b32.xlu0 %v513, 84
        %v515 = vpop.permute.xlu0 %514
        %516 = vrot.lane.b32.xlu0 %v448, 84
        %v517 = vpop.permute.xlu0 %516
        %518 = vrot.lane.b32.xlu0 %v382, 84
        %v519 = vpop.permute.xlu0 %518
        %520 = vrot.lane.b32.xlu0 %v294, 84
        %v521 = vpop.permute.xlu0 %520
        %vm522 = vcmask 687104
        %v523 = vsel %vm522, %v515, %v517
        %v524 = vsel %vm522, %v517, %v519
        %v525 = vsel %vm522, %v519, %v521
        %v526 = vrot.slane %v253, 1
        %v527 = vrot.slane %v256, 1
        %v528 = vrot.slane %v259, 1
        %v529 = vrot.slane %v262, 1
        %530 = vrot.lane.b32.xlu0 %v526, 68
        %v531 = vpop.permute.xlu0 %530
        %532 = vrot.lane.b32.xlu0 %v527, 68
        %v533 = vpop.permute.xlu0 %532
        %534 = vrot.lane.b32.xlu0 %v528, 68
        %v535 = vpop.permute.xlu0 %534
        %536 = vrot.lane.b32.xlu0 %v529, 68
        %v537 = vpop.permute.xlu0 %536
        %vm538 = vcmask 556032
        %v539 = vsel %vm538, %v531, %v533
        %v540 = vsel %vm538, %v533, %v535
        %v541 = vsel %vm538, %v535, %v537
        %vm545 = vcmask 1040384
        %vm546 = vsmask.f32 256
        %vm547 = vmand %vm545, %vm546
        %v548 = vsel %vm547, %v215, %v273
        %v549 = vsel %vm547, %v222, %v274
        %v550 = vsel %vm547, %v223, %v275
        %vm551 = vcmask 1040384
        %v554 = vsel %vm551, %v548, %v313
        %v558 = vsel %vm551, %v549, %v314
        %v562 = vsel %vm551, %v550, %v315
        %vm564 = vcmask 1041408
        %vm565 = vsmask.f32 1280
        %vm566 = vmand %vm564, %vm565
        %v567 = vsel %vm566, %v554, %v329
        %v568 = vsel %vm566, %v558, %v330
        %v569 = vsel %vm566, %v562, %v331
        %vm570 = vcmask 1041408
        %v573 = vsel %vm570, %v567, %v353
        %v577 = vsel %vm570, %v568, %v354
        %v581 = vsel %vm570, %v569, %v355
        %vm583 = vcmask 1042432
        %vm584 = vsmask.f32 2304
        %vm585 = vmand %vm583, %vm584
        %v586 = vsel %vm585, %v573, %v369
        %v587 = vsel %vm585, %v577, %v370
        %v588 = vsel %vm585, %v581, %v371
        %vm589 = vcmask 1042432
        %v592 = vsel %vm589, %v586, %v393
        %v596 = vsel %vm589, %v587, %v394
        %v600 = vsel %vm589, %v588, %v395
        %vm602 = vcmask 1043456
        %vm603 = vsmask.f32 3328
        %vm604 = vmand %vm602, %vm603
        %v605 = vsel %vm604, %v592, %v409
        %v606 = vsel %vm604, %v596, %v410
        %v607 = vsel %vm604, %v600, %v411
        %vm608 = vcmask 1043456
        %v611 = vsel %vm608, %v605, %v426
        %v615 = vsel %vm608, %v606, %v427
        %v619 = vsel %vm608, %v607, %v428
        %vm621 = vcmask 1044480
        %vm622 = vsmask.f32 4352
        %vm623 = vmand %vm621, %vm622
        %v624 = vsel %vm623, %v611, %v442
        %v625 = vsel %vm623, %v615, %v443
        %v626 = vsel %vm623, %v619, %v444
        %vm627 = vcmask 1044480
        %v630 = vsel %vm627, %v624, %v459
        %v634 = vsel %vm627, %v625, %v460
        %v638 = vsel %vm627, %v626, %v461
        %vm640 = vcmask 1045504
        %vm641 = vsmask.f32 5376
        %vm642 = vmand %vm640, %vm641
        %v643 = vsel %vm642, %v630, %v475
        %v644 = vsel %vm642, %v634, %v476
        %v645 = vsel %vm642, %v638, %v477
        %vm646 = vcmask 1045504
        %v649 = vsel %vm646, %v643, %v491
        %v653 = vsel %vm646, %v644, %v492
        %v657 = vsel %vm646, %v645, %v493
        %vm659 = vcmask 1046528
        %vm660 = vsmask.f32 6400
        %vm661 = vmand %vm659, %vm660
        %v662 = vsel %vm661, %v649, %v507
        %v663 = vsel %vm661, %v653, %v508
        %v664 = vsel %vm661, %v657, %v509
        %vm665 = vcmask 1046528
        %v668 = vsel %vm665, %v662, %v523
        %v672 = vsel %vm665, %v663, %v524
        %v676 = vsel %vm665, %v664, %v525
        %vm678 = vcmask 1047552
        %vm679 = vsmask.f32 7424
        %vm680 = vmand %vm678, %vm679
        %v681 = vsel %vm680, %v668, %v539
        %v682 = vsel %vm680, %v672, %v540
        %v683 = vsel %vm680, %v676, %v541
        %690 = vrot.lane.b32.xlu0 %v342, 109
        %v691 = vpop.permute.xlu0 %690
        %692 = vrot.lane.b32.xlu0 %v242, 109
        %v693 = vpop.permute.xlu0 %692
        %694 = vrot.lane.b32.xlu0 %v343, 109
        %v695 = vpop.permute.xlu0 %694
        %696 = vrot.lane.b32.xlu0 %v250, 109
        %v697 = vpop.permute.xlu0 %696
        %vm698 = vcmask 891904
        %v699 = vsel %vm698, %v691, %v693
        %v700 = vsel %vm698, %v693, %v695
        %v701 = vsel %vm698, %v695, %v697
        %v704 = vsel %vm547, %v242, %v273
        %v705 = vsel %vm547, %v249, %v274
        %v706 = vsel %vm547, %v250, %v275
        %v707 = vsel %vm547, %v251, %v271
        %v709 = vsel %vm551, %v704, %v313
        %v712 = vsel %vm551, %v705, %v314
        %v715 = vsel %vm551, %v706, %v315
        %v719 = vsel %vm551, %v707, %v311
        %v721 = vsel %vm566, %v709, %v329
        %v722 = vsel %vm566, %v712, %v330
        %v723 = vsel %vm566, %v715, %v331
        %v724 = vsel %vm566, %v719, %v327
        %v727 = vsel %vm570, %v721, %v699
        %v731 = vsel %vm570, %v722, %v700
        %v735 = vsel %vm570, %v723, %v701
        %v739 = vsel %vm570, %v724, %v697
        %v741 = vsel %vm585, %v727, %v369
        %v742 = vsel %vm585, %v731, %v370
        %v743 = vsel %vm585, %v735, %v371
        %v744 = vsel %vm585, %v739, %v367
        %v746 = vsel %vm589, %v741, %v393
        %v749 = vsel %vm589, %v742, %v394
        %v752 = vsel %vm589, %v743, %v395
        %v756 = vsel %vm589, %v744, %v391
        %v758 = vsel %vm604, %v746, %v409
        %v759 = vsel %vm604, %v749, %v410
        %v760 = vsel %vm604, %v752, %v411
        %v761 = vsel %vm604, %v756, %v407
        %v763 = vsel %vm608, %v758, %v426
        %v765 = vsel %vm608, %v759, %v427
        %v767 = vsel %vm608, %v760, %v428
        %v770 = vsel %vm608, %v761, %v424
        %775 = vrot.lane.b32.xlu0 %v763, 67
        %v776 = vpop.permute.xlu0 %775
        %777 = vrot.lane.b32.xlu0 %v765, 67
        %v778 = vpop.permute.xlu0 %777
        %779 = vrot.lane.b32.xlu0 %v767, 67
        %v780 = vpop.permute.xlu0 %779
        %781 = vrot.lane.b32.xlu0 %v770, 67
        %v782 = vpop.permute.xlu0 %781
        %vm783 = vcmask 547840
        %v784 = vsel %vm783, %v776, %v778
        %v785 = vsel %vm783, %v778, %v780
        %v786 = vsel %vm783, %v780, %v782
        %v791 = vunpack.c.l.b16 %v194
        %v792 = vunpack.c.l.b16 %v195
        %v793 = vunpack.c.l.b16 %v196
        %v794 = vunpack.c.l.b16 %v197
        %v795 = vpack.c.b16 %v792, %v791
        %v796 = vpack.c.b16 %v794, %v793
        %vm797 = vcmask 203776
        %v799 = vsel %vm797, %v795, 0
        %v802 = vsel %vm797, %v796, 0
        %v804 = vsel %vm608, 4294967295, 65535
        %v805 = vsel %vm627, %v804, 0
        %v807 = vand.u32 %v784, %v805
        %v810 = vand.u32 %v785, %v805
        %v813 = vand.u32 %v786, %v805
        %815 = vmatprep.subr.bf16.mxu0 %v682
        %816 = vmatpush1.bf16.msra.mxu0 %v681
        %817 = vmatprep.subr.bf16.mxu0 %v810
        %818 = vmatpush1.bf16.msra.mxu0 %v807
        %819 = vmatprep.subr.bf16.mxu0 0
        %820 = vmatpush1.bf16.msra.mxu0 0
        %821 = vmatprep.subr.bf16.mxu0 0
        %822 = vmatpush1.bf16.msra.mxu0 0
        %823 = vmatprep.subr.bf16.mxu0 0
        %824 = vmatpush1.bf16.msra.mxu0 0
        %825 = vmatprep.subr.bf16.mxu0 0
        %826 = vmatpush1.bf16.msra.mxu0 0
        %827 = vmatprep.subr.bf16.mxu0 0
        %828 = vmatpush1.bf16.msra.mxu0 0
        %829 = vmatprep.subr.bf16.mxu0 0
        %830 = vmatpush1.bf16.msra.mxu0 0
        %831 = vmatprep.subr.bf16.mxu0 0
        %832 = vmatpush1.bf16.msra.mxu0 0
        %833 = vmatprep.subr.bf16.mxu0 0
        %834 = vmatpush1.bf16.msra.mxu0 0
        %835 = vmatprep.subr.bf16.mxu0 0
        %836 = vmatpush1.bf16.msra.mxu0 0
        %837 = vmatprep.subr.bf16.mxu0 0
        %838 = vmatpush1.bf16.msra.mxu0 0
        %839 = vmatprep.subr.bf16.mxu0 0
        %840 = vmatpush1.bf16.msra.mxu0 0
        %841 = vmatprep.subr.bf16.mxu0 0
        %842 = vmatpush1.bf16.msra.mxu0 0
        %843 = vmatprep.subr.bf16.mxu0 0
        %844 = vmatpush1.bf16.msra.mxu0 0
        %845 = vmatprep.subr.bf16.mxu0 0
        %846 = vmatpush1.bf16.msra.mxu0 0
        %847 = vmatprep.mubr.bf16.mxu0 0
        %848 = vmatmul.mubr.bf16.gmra.mrb[0].mxu0 %v799
        %v849 = vpop.f32.mrb[0].mxu0
        %v850 = vadd.f32 0.0, %v849
        %v851 = vpop.f32.mrb[0].mxu0
        %v852 = vadd.f32 0.0, %v851
        %v853 = vpop.f32.mrb[0].mxu0
        %v854 = vadd.f32 0.0, %v853
        %v855 = vpop.f32.mrb[0].mxu0
        %v856 = vadd.f32 0.0, %v855
        %857 = vmatprep.mubr.bf16.mxu0 0
        %858 = vmatmul.mubr.bf16.gmra.mrb[0].mxu0 %v802
        %v859 = vpop.f32.mrb[0].mxu0
        %v860 = vadd.f32 0.0, %v859
        %v861 = vpop.f32.mrb[0].mxu0
        %v862 = vadd.f32 0.0, %v861
        %v863 = vpop.f32.mrb[0].mxu0
        %v864 = vadd.f32 0.0, %v863
        %v865 = vpop.f32.mrb[0].mxu0
        %v866 = vadd.f32 0.0, %v865
        %867 = vdwg.mxu0
        %868 = vmatprep.subr.bf16.mxu0 0
        %869 = vmatpush1.bf16.msra.mxu0 %v683
        %870 = vmatprep.subr.bf16.mxu0 0
        %871 = vmatpush1.bf16.msra.mxu0 %v813
        %872 = vmatprep.subr.bf16.mxu0 0
        %873 = vmatpush1.bf16.msra.mxu0 0
        %874 = vmatprep.subr.bf16.mxu0 0
        %875 = vmatpush1.bf16.msra.mxu0 0
        %876 = vmatprep.subr.bf16.mxu0 0
        %877 = vmatpush1.bf16.msra.mxu0 0
        %878 = vmatprep.subr.bf16.mxu0 0
        %879 = vmatpush1.bf16.msra.mxu0 0
        %880 = vmatprep.subr.bf16.mxu0 0
        %881 = vmatpush1.bf16.msra.mxu0 0
        %882 = vmatprep.subr.bf16.mxu0 0
        %883 = vmatpush1.bf16.msra.mxu0 0
        %884 = vmatprep.subr.bf16.mxu0 0
        %885 = vmatpush1.bf16.msra.mxu0 0
        %886 = vmatprep.subr.bf16.mxu0 0
        %887 = vmatpush1.bf16.msra.mxu0 0
        %888 = vmatprep.subr.bf16.mxu0 0
        %889 = vmatpush1.bf16.msra.mxu0 0
        %890 = vmatprep.subr.bf16.mxu0 0
        %891 = vmatpush1.bf16.msra.mxu0 0
        %892 = vmatprep.subr.bf16.mxu0 0
        %893 = vmatpush1.bf16.msra.mxu0 0
        %894 = vmatprep.subr.bf16.mxu0 0
        %895 = vmatpush1.bf16.msra.mxu0 0
        %896 = vmatprep.subr.bf16.mxu0 0
        %897 = vmatpush1.bf16.msra.mxu0 0
        %898 = vmatprep.subr.bf16.mxu0 0
        %899 = vmatpush1.bf16.msra.mxu0 0
        %900 = vmatprep.mubr.bf16.mxu0 0
        %901 = vmatmul.mubr.bf16.gmra.mrb[0].mxu0 %v799
        %v902 = vpop.f32.mrb[0].mxu0
        %v903 = vadd.f32 0.0, %v902
        %v904 = vpop.f32.mrb[0].mxu0
        %v905 = vpop.f32.mrb[0].mxu0
        %v906 = vadd.f32 0.0, %v905
        %v907 = vpop.f32.mrb[0].mxu0
        %908 = vmatprep.mubr.bf16.mxu0 0
        %909 = vmatmul.mubr.bf16.gmra.mrb[0].mxu0 %v802
        %v910 = vpop.f32.mrb[0].mxu0
        %v911 = vadd.f32 0.0, %v910
        %v912 = vpop.f32.mrb[0].mxu0
        %v913 = vpop.f32.mrb[0].mxu0
        %v914 = vadd.f32 0.0, %v913
        %v915 = vpop.f32.mrb[0].mxu0
        %916 = vdwg.mxu0
        %v917 = vmax.f32 %v850, -3.0
        %v918 = vmax.f32 %v852, -3.0
        %v919 = vmax.f32 %v903, -3.0
        %v920 = vmax.f32 %v854, -3.0
        %v921 = vmax.f32 %v856, -3.0
        %v922 = vmax.f32 %v906, -3.0
        %v923 = vmax.f32 %v860, -3.0
        %v924 = vmax.f32 %v862, -3.0
        %v925 = vmax.f32 %v911, -3.0
        %v926 = vmax.f32 %v864, -3.0
        %v927 = vmax.f32 %v866, -3.0
        %v928 = vmax.f32 %v914, -3.0
        %v929 = vmin.f32 %v917, 3.0
        %v930 = vmin.f32 %v918, 3.0
        %v931 = vmin.f32 %v919, 3.0
        %v932 = vmin.f32 %v920, 3.0
        %v933 = vmin.f32 %v921, 3.0
        %v934 = vmin.f32 %v922, 3.0
        %v935 = vmin.f32 %v923, 3.0
        %v936 = vmin.f32 %v924, 3.0
        %v937 = vmin.f32 %v925, 3.0
        %v938 = vmin.f32 %v926, 3.0
        %v939 = vmin.f32 %v927, 3.0
        %v940 = vmin.f32 %v928, 3.0
        %941 = vst [vmem:[%s191] sm:$0xff] %v929
        %942 = vst [vmem:[%s191 + $0x8] sm:$0xff] %v930
        %943 = vst [vmem:[%s191 + $0x10] sm:$0xff] %v931
        %944 = vst [vmem:[%s191 + $0x18] sm:$0xff] %v932
        %945 = vst [vmem:[%s191 + $0x20] sm:$0xff] %v933
        %946 = vst [vmem:[%s191 + $0x28] sm:$0xff] %v934
        %947 = vst [vmem:[%s191 + $0x30] sm:$0xff] %v935
        %948 = vst [vmem:[%s191 + $0x38] sm:$0xff] %v936
        %949 = vst [vmem:[%s191 + $0x40] sm:$0xff] %v937
        %950 = vst [vmem:[%s191 + $0x48] sm:$0x3f] %v938
        %951 = vst [vmem:[%s191 + $0x50] sm:$0x3f] %v939
        %952 = vst [vmem:[%s191 + $0x58] sm:$0x3f] %v940
        %s953 = smul.u32 3, %s19
        %p954 = scmp.lt.s32.totalorder %s18, 1
        %s955 = scalar_select %p954, %s18, 1
        %p956 = scmp.lt.s32.totalorder %s953, 2
        %s957 = scalar_select %p956, %s953, 2
        %s958 = smul.addr %s955, 12
        %s959 = sadd.s32 %s957, %s958
        %s960 = smul.addr %s959, 8
        %s961 = scalar_lea.vmem %s2, %s960
        // Predicated region
        $region33: #{tpu_custom_call.1} parent=27 // pred_check
          %p962 = pneg %p95
        $region34: #{tpu_custom_call.1} parent=27 // pred_check_branch
          %964 = sbr.rel (%p962) target = $region36
        $region35: #{tpu_custom_call.1} parent=27 // pred_region
          %s965 = smul.u32 3, %s19
        $region36: #{tpu_custom_call.1} parent=27 // pred_fallthru
          _
      $region28: #{tpu_custom_call.1} parent=5 // pred_fallthru
        _
      %p966 = scmp.le.s32.totalorder 2, %s9
      // Predicated region
      $region37: #{tpu_custom_call.1} parent=5 // pred_check
        %p967 = pneg %p966
      $region38: #{tpu_custom_call.1} parent=5 // pred_check_branch
        %969 = sbr.rel (%p967) target = $region40
      $region39: #{tpu_custom_call.1} parent=5 // pred_region
        %s970 = ssub.s32 %s9, 2
        // Predicated region
        $region41: #{tpu_custom_call.1} parent=39 // pred_check
          %p971 = pneg %p101
        $region42: #{tpu_custom_call.1} parent=39 // pred_check_branch
          %973 = sbr.rel (%p971) target = $region44
        $region43: #{tpu_custom_call.1} parent=39 // pred_region
          %s974 = smul.u32 3, %s21
          %p975 = scmp.lt.s32.totalorder %s20, 1
          %s976 = scalar_select %p975, %s20, 1
          %p977 = scmp.lt.s32.totalorder %s974, 2
          %s978 = scalar_select %p977, %s974, 2
          %s979 = smul.addr %s976, 12
          %s980 = sadd.s32 %s978, %s979
          %s981 = smul.addr %s980, 8
          %s982 = scalar_lea.vmem %s2, %s981
        $region44: #{tpu_custom_call.1} parent=39 // pred_fallthru
          _
      $region40: #{tpu_custom_call.1} parent=5 // pred_fallthru
        _
    $region6: #{tpu_custom_call.1} parent=1 // loop_footer
      %s13 = sadd.s32 1, %s9
    $region7: #{tpu_custom_call.1} parent=1 // loop_footer_branch
      %8 = sbr.rel target = $region3
    $region8: #{tpu_custom_call.1} parent=1 // loop_exit
      _
    %983 = vsyncpa [#allocation3], 1
    %s984 = scalar_lea.sflag [#allocation3], 1
    %985 = vsyncpa %s984, 1

</llo_original>
